<compile_context>
chip_gen: v6e
topology: v6e:2x2x1
jax: 0.10.0
libtpu: 0.0.40
codegen_flags: <defaults>
</compile_context>

<pallas_src>
import math
from functools import partial

import jax
import jax.numpy as jnp
import numpy as np
from jax import lax
from jax.experimental import pallas as pl
from jax.experimental.pallas import tpu as pltpu

LN_EPS = 1e-5  # torch.nn.LayerNorm default eps


def _round_up(x, m):
    return (x + m - 1) // m * m


def _vmem_capacity_bytes():
    try:
        return int(pltpu.get_tpu_info().vmem_capacity_bytes)
    except Exception:
        return 64 << 20  # conservative (v7x per-TC VMEM)


def gene_encoder_kernel(vp,                               # static: emb-region width
                        idx_ref,                          # (tm, 2) int32 [gene_id, layer_id]
                        thi_ref, tlo_ref,                 # (K, D) bf16 stacked table hi/lo
                        g_ref, b_ref,                     # (1, D) LN affine
                        out_ref):                         # (tm, D) output tile
    tm, D = out_ref.shape
    K = thi_ref.shape[0]                                  # K = Vp + Lp (multiple of 128)

    idx = idx_ref[...]                                    # (tm, 2)
    ids = idx[:, 0:1]                                     # (tm, 1) gene ids   -> rows [0, Vp)
    lids = idx[:, 1:2] + vp                               # (tm, 1) layer ids  -> rows [Vp, K)

    # Combined one-hot selecting both emb[id] and pe[lid]; built in f32 (safe
    # on v5e's f32-only VALU) and packed once to bf16 for the MXU LHS.
    # An out-of-range id simply matches no row (zero vector) -> no OOB read.
    iota = lax.broadcasted_iota(jnp.int32, (tm, K), 1)
    mask = jnp.logical_or(iota == ids, iota == lids)
    oh = jnp.where(mask, 1.0, 0.0).astype(jnp.bfloat16)   # (tm, K)

    # emb[id] + pe[lid] in one contraction; bf16 hi/lo split of the f32 table
    # keeps the gather exact to ~2^-18 with only 2 single-pass MXU matmuls.
    x = jnp.dot(oh, thi_ref[...], preferred_element_type=jnp.float32)
    x = x + jnp.dot(oh, tlo_ref[...], preferred_element_type=jnp.float32)

    # Two-pass LayerNorm over the feature (lane) axis — matches torch.
    mean = jnp.sum(x, axis=-1, keepdims=True) * (1.0 / D)
    xc = x - mean
    var = jnp.sum(xc * xc, axis=-1, keepdims=True) * (1.0 / D)
    y = xc * lax.rsqrt(var + LN_EPS)
    y = y * g_ref[...] + b_ref[...]

    # Dropout: nn.Dropout is the identity in eval mode.
    # TODO(synk): training-mode stochastic dropout (pltpu.prng_*) not emitted.
    out_ref[...] = y.astype(out_ref.dtype)


def prepare_gene_encoder_params(emb_table, pe_table, gamma, beta):
    """Hoisted, call-invariant parameter prep: pad to full-lane K, stack the
    two tables, split f32 -> bf16 hi/lo once."""
    V, D = emb_table.shape
    L = pe_table.shape[0]
    Vp = _round_up(V, 128)
    Lp = _round_up(L, 128)

    table = jnp.zeros((Vp + Lp, D), jnp.float32)
    table = table.at[:V].set(jnp.asarray(emb_table, jnp.float32))
    table = table.at[Vp:Vp + L].set(jnp.asarray(pe_table, jnp.float32))
    t_hi = table.astype(jnp.bfloat16)
    t_lo = (table - t_hi.astype(jnp.float32)).astype(jnp.bfloat16)

    return {
        "t_hi": t_hi,
        "t_lo": t_lo,
        "gamma": jnp.asarray(gamma, jnp.float32).reshape(1, D),
        "beta": jnp.asarray(beta, jnp.float32).reshape(1, D),
        "vp": int(Vp),
        "d": int(D),
    }


def gene_encoder(gene_ids, layer_idx, params, *, tm=512, out_dtype=jnp.float32):
    """Pallas implementation of GeneEncoder.forward(x, sorted_layer_idx).

    out_dtype=jnp.bfloat16 halves the HBM writeback if downstream consumes bf16.
    """
    B, S = gene_ids.shape
    D = params["d"]
    Vp = params["vp"]
    t_hi, t_lo = params["t_hi"], params["t_lo"]
    K = t_hi.shape[0]
    N = B * S

    # Large token tiles (default 512 rows) amortise per-grid-step overhead,
    # clamped to the 8-aligned padded token count.
    tm = max(8, min(_round_up(tm, 8), _round_up(N, 8)))
    Np = _round_up(N, tm)

    # Packed (Np, 2) int32 index input -> single per-tile DMA for both id sets.
    idx = jnp.stack(
        [jnp.asarray(gene_ids, jnp.int32).reshape(N),
         jnp.asarray(layer_idx, jnp.int32).reshape(N)], axis=1)
    if Np != N:
        idx = jnp.pad(idx, ((0, Np - N), (0, 0)))  # padded rows select valid data, sliced off

    out_itemsize = jnp.dtype(out_dtype).itemsize
    # Generation-aware VMEM budget: residents (double-buffered by the default
    # pipeline), I/O tiles, in-kernel one-hot/f32 intermediates, slack; capped
    # below physical VMEM capacity.
    table_bytes = 2 * 2 * (K * D * 2)                       # two bf16 tables, 2 buffers each
    io_bytes = 2 * (tm * 128 * 4 + tm * D * out_itemsize)   # idx (lane-padded) + output
    work_bytes = tm * K * 2 + 2 * tm * D * 4                # one-hot + f32 intermediates
    vmem_bytes = table_bytes + io_bytes + work_bytes + (4 << 20)
    vmem_bytes = int(max(min(vmem_bytes, _vmem_capacity_bytes() - (2 << 20)), 4 << 20))

    out = pl.pallas_call(
        partial(gene_encoder_kernel, Vp),
        out_shape=jax.ShapeDtypeStruct((Np, D), out_dtype),
        grid_spec=pltpu.PrefetchScalarGridSpec(
            num_scalar_prefetch=0,
            grid=(Np // tm,),
            in_specs=[
                pl.BlockSpec((tm, 2), lambda i: (i, 0)),   # packed [gene_id, layer_id]
                pl.BlockSpec((K, D), lambda i: (0, 0)),    # stacked table (bf16 hi) resident
                pl.BlockSpec((K, D), lambda i: (0, 0)),    # stacked table (bf16 lo) resident
                pl.BlockSpec((1, D), lambda i: (0, 0)),    # LN gamma
                pl.BlockSpec((1, D), lambda i: (0, 0)),    # LN beta
            ],
            out_specs=pl.BlockSpec((tm, D), lambda i: (i, 0)),
        ),
        compiler_params=pltpu.CompilerParams(
            dimension_semantics=("parallel",),
            vmem_limit_bytes=vmem_bytes),
    )(idx, t_hi, t_lo, params["gamma"], params["beta"])

    return out[:N].reshape(B, S, D)


def make_topo_pe(max_layer, d_model):
    """Same buffer as TopoLayerEncoding.__init__ (shape (max_layer, d_model))."""
    position = jnp.arange(max_layer, dtype=jnp.float32)[:, None]
    div_term = jnp.exp(jnp.arange(0, d_model, 2, dtype=jnp.float32)
                       * (-math.log(10000.0) / d_model))
    pe = jnp.zeros((max_layer, d_model), dtype=jnp.float32)
    pe = pe.at[:, 0::2].set(jnp.sin(position * div_term))
    pe = pe.at[:, 1::2].set(jnp.cos(position * div_term))
    return pe


def reference(gene_ids, layer_idx, emb_table, pe_table, gamma, beta):
    x = emb_table[gene_ids] + pe_table[layer_idx]
    mean = x.mean(-1, keepdims=True)
    var = ((x - mean) ** 2).mean(-1, keepdims=True)
    y = (x - mean) / jnp.sqrt(var + LN_EPS)
    return y * gamma + beta


if __name__ == "__main__":
    # Small synthetic config consistent with the module.
    num_embeddings = 64
    embedding_dim = 128
    padding_idx = 0
    max_layer = 100
    B, S = 2, 8

    key = jax.random.PRNGKey(0)
    k_emb, k_g, k_b, k_ids, k_lay = jax.random.split(key, 5)

    # nn.Embedding-style normal init with the padding row zeroed; LN affine
    # slightly perturbed from 1/0 so gamma/beta application is exercised.
    emb_table = jax.random.normal(k_emb, (num_embeddings, embedding_dim), jnp.float32)
    emb_table = emb_table.at[padding_idx].set(0.0)
    gamma = 1.0 + 0.1 * jax.random.normal(k_g, (embedding_dim,), jnp.float32)
    beta = 0.1 * jax.random.normal(k_b, (embedding_dim,), jnp.float32)
    pe_table = make_topo_pe(max_layer, embedding_dim)

    gene_ids = jax.random.randint(k_ids, (B, S), 1, num_embeddings, dtype=jnp.int32)
    sorted_layer_idx = jax.random.randint(k_lay, (B, S), 0, max_layer, dtype=jnp.int32)

    params = prepare_gene_encoder_params(emb_table, pe_table, gamma, beta)
    out = gene_encoder(gene_ids, sorted_layer_idx, params)
    out = jax.block_until_ready(out)

    ref = reference(gene_ids, sorted_layer_idx, emb_table, pe_table, gamma, beta)
    np.testing.assert_allclose(np.asarray(out), np.asarray(ref),
                               rtol=1e-4, atol=1e-4)

    print("KERNEL_OK")
</pallas_src>

<mosaic_0001>
module attributes {stable_mosaic.version = 11 : i64} {
  func.func @gene_encoder_kernel(%arg0: i32, %arg1: memref<16x2xi32, #tpu.memory_space<vmem>>, %arg2: memref<256x128xbf16, #tpu.memory_space<vmem>>, %arg3: memref<256x128xbf16, #tpu.memory_space<vmem>>, %arg4: memref<1x128xf32, #tpu.memory_space<vmem>>, %arg5: memref<1x128xf32, #tpu.memory_space<vmem>>, %arg6: memref<16x128xf32, #tpu.memory_space<vmem>>) attributes {dimension_semantics = [#tpu.dimension_semantics<parallel>], iteration_bounds = array<i64: 1>, scalar_prefetch = 0 : i64, scratch_operands = 0 : i64, tpu.core_type = #tpu.core_type<tc>, window_params = [{transform_indices = @transform_0, window_bounds = array<i64: 16, 2>}, {pipeline_mode = #tpu.pipeline_mode<synchronous>, transform_indices = @transform_1, window_bounds = array<i64: 256, 128>}, {pipeline_mode = #tpu.pipeline_mode<synchronous>, transform_indices = @transform_2, window_bounds = array<i64: 256, 128>}, {pipeline_mode = #tpu.pipeline_mode<synchronous>, transform_indices = @transform_3, window_bounds = array<i64: 1, 128>}, {pipeline_mode = #tpu.pipeline_mode<synchronous>, transform_indices = @transform_4, window_bounds = array<i64: 1, 128>}, {transform_indices = @transform_5, window_bounds = array<i64: 16, 128>}]} {
    %c0 = arith.constant 0 : index
    %c0_0 = arith.constant 0 : index
    %0 = vector.load %arg1[%c0, %c0_0] : memref<16x2xi32, #tpu.memory_space<vmem>>, vector<16x2xi32>
    %1 = vector.extract_strided_slice %0 {offsets = [0, 0], sizes = [16, 1], strides = [1, 1]} : vector<16x2xi32> to vector<16x1xi32>
    %2 = vector.extract_strided_slice %0 {offsets = [0, 1], sizes = [16, 1], strides = [1, 1]} : vector<16x2xi32> to vector<16x1xi32>
    %c128_i32 = arith.constant 128 : i32
    %3 = vector.broadcast %c128_i32 : i32 to vector<16x1xi32>
    %4 = arith.addi %2, %3 : vector<16x1xi32>
    %5 = tpu.iota {dimensions = array<i32: 1>} : vector<16x256xi32>
    %6 = vector.broadcast %1 : vector<16x1xi32> to vector<16x256xi32>
    %7 = arith.cmpi eq, %5, %6 : vector<16x256xi32>
    %8 = vector.broadcast %4 : vector<16x1xi32> to vector<16x256xi32>
    %9 = arith.cmpi eq, %5, %8 : vector<16x256xi32>
    %10 = arith.ori %7, %9 : vector<16x256xi1>
    %cst = arith.constant 1.000000e+00 : f32
    %cst_1 = arith.constant 0.000000e+00 : f32
    %11 = vector.broadcast %cst : f32 to vector<16x256xf32>
    %12 = vector.broadcast %cst_1 : f32 to vector<16x256xf32>
    %13 = arith.select %10, %11, %12 : vector<16x256xi1>, vector<16x256xf32>
    %14 = arith.truncf %13 : vector<16x256xf32> to vector<16x256xbf16>
    %c0_2 = arith.constant 0 : index
    %c0_3 = arith.constant 0 : index
    %15 = vector.load %arg2[%c0_2, %c0_3] : memref<256x128xbf16, #tpu.memory_space<vmem>>, vector<256x128xbf16>
    %cst_4 = arith.constant dense<0.000000e+00> : vector<16x128xf32>
    %16 = tpu.matmul %14, %15, %cst_4 {dimension_numbers = #tpu.dot_dimension_numbers<[1], [0], [0], [1], [0, 0, 1, 1], [], []>} : vector<16x256xbf16>, vector<256x128xbf16>, vector<16x128xf32> -> vector<16x128xf32>
    %c0_5 = arith.constant 0 : index
    %c0_6 = arith.constant 0 : index
    %17 = vector.load %arg3[%c0_5, %c0_6] : memref<256x128xbf16, #tpu.memory_space<vmem>>, vector<256x128xbf16>
    %cst_7 = arith.constant dense<0.000000e+00> : vector<16x128xf32>
    %18 = tpu.matmul %14, %17, %cst_7 {dimension_numbers = #tpu.dot_dimension_numbers<[1], [0], [0], [1], [0, 0, 1, 1], [], []>} : vector<16x256xbf16>, vector<256x128xbf16>, vector<16x128xf32> -> vector<16x128xf32>
    %19 = arith.addf %16, %18 : vector<16x128xf32>
    %cst_8 = arith.constant dense<0.000000e+00> : vector<16xf32>
    %20 = vector.multi_reduction <add>, %19, %cst_8 [1] : vector<16x128xf32> to vector<16xf32>
    %21 = vector.shape_cast %20 : vector<16xf32> to vector<16x1xf32>
    %cst_9 = arith.constant 7.812500e-03 : f32
    %22 = vector.broadcast %cst_9 : f32 to vector<16x1xf32>
    %23 = arith.mulf %21, %22 : vector<16x1xf32>
    %24 = vector.broadcast %23 : vector<16x1xf32> to vector<16x128xf32>
    %25 = arith.subf %19, %24 : vector<16x128xf32>
    %26 = arith.mulf %25, %25 : vector<16x128xf32>
    %cst_10 = arith.constant dense<0.000000e+00> : vector<16xf32>
    %27 = vector.multi_reduction <add>, %26, %cst_10 [1] : vector<16x128xf32> to vector<16xf32>
    %28 = vector.shape_cast %27 : vector<16xf32> to vector<16x1xf32>
    %cst_11 = arith.constant 7.812500e-03 : f32
    %29 = vector.broadcast %cst_11 : f32 to vector<16x1xf32>
    %30 = arith.mulf %28, %29 : vector<16x1xf32>
    %cst_12 = arith.constant 9.99999974E-6 : f32
    %31 = vector.broadcast %cst_12 : f32 to vector<16x1xf32>
    %32 = arith.addf %30, %31 : vector<16x1xf32>
    %33 = math.rsqrt %32 : vector<16x1xf32>
    %34 = vector.broadcast %33 : vector<16x1xf32> to vector<16x128xf32>
    %35 = arith.mulf %25, %34 : vector<16x128xf32>
    %c0_13 = arith.constant 0 : index
    %c0_14 = arith.constant 0 : index
    %36 = vector.load %arg4[%c0_13, %c0_14] : memref<1x128xf32, #tpu.memory_space<vmem>>, vector<1x128xf32>
    %37 = vector.broadcast %36 : vector<1x128xf32> to vector<16x128xf32>
    %38 = arith.mulf %35, %37 : vector<16x128xf32>
    %c0_15 = arith.constant 0 : index
    %c0_16 = arith.constant 0 : index
    %39 = vector.load %arg5[%c0_15, %c0_16] : memref<1x128xf32, #tpu.memory_space<vmem>>, vector<1x128xf32>
    %40 = vector.broadcast %39 : vector<1x128xf32> to vector<16x128xf32>
    %41 = arith.addf %38, %40 : vector<16x128xf32>
    %c0_17 = arith.constant 0 : index
    %c0_18 = arith.constant 0 : index
    %42 = vector.load %arg6[%c0_17, %c0_18] : memref<16x128xf32, #tpu.memory_space<vmem>>, vector<16x128xf32>
    tpu.vector_store %arg6[%c0_17, %c0_18], %41 {strides = array<i32>} : memref<16x128xf32, #tpu.memory_space<vmem>>, vector<16x128xf32>,
    return
  }
  func.func @transform_0(%arg0: i32) -> (i32, i32) {
    %c0_i32 = arith.constant 0 : i32
    %c0_i32_0 = arith.constant 0 : i32
    return %arg0, %c0_i32 : i32, i32
  }
  func.func @transform_1(%arg0: i32) -> (i32, i32) {
    %c0_i32 = arith.constant 0 : i32
    %c0_i32_0 = arith.constant 0 : i32
    %c0_i32_1 = arith.constant 0 : i32
    return %c0_i32, %c0_i32_0 : i32, i32
  }
  func.func @transform_2(%arg0: i32) -> (i32, i32) {
    %c0_i32 = arith.constant 0 : i32
    %c0_i32_0 = arith.constant 0 : i32
    %c0_i32_1 = arith.constant 0 : i32
    return %c0_i32, %c0_i32_0 : i32, i32
  }
  func.func @transform_3(%arg0: i32) -> (i32, i32) {
    %c0_i32 = arith.constant 0 : i32
    %c0_i32_0 = arith.constant 0 : i32
    %c0_i32_1 = arith.constant 0 : i32
    return %c0_i32, %c0_i32_0 : i32, i32
  }
  func.func @transform_4(%arg0: i32) -> (i32, i32) {
    %c0_i32 = arith.constant 0 : i32
    %c0_i32_0 = arith.constant 0 : i32
    %c0_i32_1 = arith.constant 0 : i32
    return %c0_i32, %c0_i32_0 : i32, i32
  }
  func.func @transform_5(%arg0: i32) -> (i32, i32) {
    %c0_i32 = arith.constant 0 : i32
    %c0_i32_0 = arith.constant 0 : i32
    return %arg0, %c0_i32 : i32, i32
  }
}

</mosaic_0001>

<llo_original>
// kernel: tpu_custom_call.1
$region0: #{tpu_custom_call.1}
  #allocation0 [shape = 'u32[]', space=smem, size = 0x4, offset = 0x4, fixed_abs, tag = 'smem constant byte address 0x4 - core index']
  #allocation1 [shape = 'u32[144,128]{1,0:T(1,128)}', space=vmem, size = 0x12000, scoped, tag = 'internal scratch']
  %s0 = inlined_call_operand.vmem [shape: s32[16,2], index: 0, kind: input, shape index: {}]
  %s1 = inlined_call_operand.hbm [shape: bf16[256,128], index: 1, kind: input, shape index: {}]
  %s2 = inlined_call_operand.hbm [shape: bf16[256,128], index: 2, kind: input, shape index: {}]
  %s3 = inlined_call_operand.vmem [shape: f32[1,128], index: 3, kind: input, shape index: {}]
  %s4 = inlined_call_operand.vmem [shape: f32[1,128], index: 4, kind: input, shape index: {}]
  %s5 = inlined_call_operand.hbm [shape: f32[16,128], index: 5, kind: output, shape index: {}]
  %s6 = sld [smem:[#allocation0]]
  $region38: #{tpu_custom_call.1} parent=0
    _
  %s8 = ssub.s32 1, %s6
  %s9 = scalar_select 0, %s8, %s6
  $region1: #{tpu_custom_call.1} parent=0
    #allocation2 [shape = 'u8[65536]{0}', space=vmem, size = 0x10000, scoped, tag = 'input window, operand 1, single buffered']
    #allocation3 [shape = 's32[1]{0}', space=sflag, size = 0x4, scoped, tag = 'scoped memory for tpu_custom_call.1']
    #allocation4 [shape = 's32[1]{0}', space=sflag, size = 0x4, scoped, tag = 'scoped memory for tpu_custom_call.1']
    #allocation5 [shape = 'u8[65536]{0}', space=vmem, size = 0x10000, scoped, tag = 'input window, operand 2, single buffered']
    #allocation6 [shape = 's32[1]{0}', space=sflag, size = 0x4, scoped, tag = 'scoped memory for tpu_custom_call.1']
    #allocation7 [shape = 'u8[8192]{0}', space=vmem, size = 0x2000, scoped, tag = 'output window, operand 0, single buffered']
    %10 = vsyncpa [#allocation3], 0
    %11 = vsyncpa [#allocation6], 0
    %12 = vsyncpa [#allocation4], 0
    // Predicated region
    $region2: #{tpu_custom_call.1} parent=1 // pred_check
      _
    $region3: #{tpu_custom_call.1} parent=1 // pred_check_branch
      %14 = sbr.rel (0) target = $region5
    $region4: #{tpu_custom_call.1} parent=1 // pred_region
      _
    $region5: #{tpu_custom_call.1} parent=1 // pred_fallthru
      _
    // Predicated region
    $region6: #{tpu_custom_call.1} parent=1 // pred_check
      _
    $region7: #{tpu_custom_call.1} parent=1 // pred_check_branch
      %16 = sbr.rel (0) target = $region9
    $region8: #{tpu_custom_call.1} parent=1 // pred_region
      %s18 = ssub.s32 2048, 2048
      %19 = vsyncadd [#allocation3], %s18
      %s20 = sshll.u32 [#allocation2], 4
      %s21 = int_to_ptr.vmem [resolvable:$true] %s20
      %26 = dma.hbm_to_vmem [thread:$0]  %s1, 2048, %s21, [#allocation3], 64, 64, 4
    $region9: #{tpu_custom_call.1} parent=1 // pred_fallthru
      _
    // Predicated region
    $region10: #{tpu_custom_call.1} parent=1 // pred_check
      _
    $region11: #{tpu_custom_call.1} parent=1 // pred_check_branch
      %28 = sbr.rel (0) target = $region13
    $region12: #{tpu_custom_call.1} parent=1 // pred_region
      %s30 = ssub.s32 2048, 2048
      %31 = vsyncadd [#allocation6], %s30
      %s32 = sshll.u32 [#allocation5], 4
      %s33 = int_to_ptr.vmem [resolvable:$true] %s32
      %38 = dma.hbm_to_vmem [thread:$0]  %s2, 2048, %s33, [#allocation6], 64, 64, 4
    $region13: #{tpu_custom_call.1} parent=1 // pred_fallthru
      _
    // Predicated region
    $region14: #{tpu_custom_call.1} parent=1 // pred_check
      _
    $region15: #{tpu_custom_call.1} parent=1 // pred_check_branch
      %40 = sbr.rel (0) target = $region17
    $region16: #{tpu_custom_call.1} parent=1 // pred_region
      _
    $region17: #{tpu_custom_call.1} parent=1 // pred_fallthru
      _
    // Predicated region
    $region18: #{tpu_custom_call.1} parent=1 // pred_check
      _
    $region19: #{tpu_custom_call.1} parent=1 // pred_check_branch
      %42 = sbr.rel (0) target = $region21
    $region20: #{tpu_custom_call.1} parent=1 // pred_region
      _
    $region21: #{tpu_custom_call.1} parent=1 // pred_fallthru
      _
    // Predicated region
    $region22: #{tpu_custom_call.1} parent=1 // pred_check
      _
    $region23: #{tpu_custom_call.1} parent=1 // pred_check_branch
      %44 = sbr.rel (0) target = $region25
    $region24: #{tpu_custom_call.1} parent=1 // pred_region
      %45 = dma.done [#allocation3], 2048
    $region25: #{tpu_custom_call.1} parent=1 // pred_fallthru
      _
    // Predicated region
    $region26: #{tpu_custom_call.1} parent=1 // pred_check
      _
    $region27: #{tpu_custom_call.1} parent=1 // pred_check_branch
      %47 = sbr.rel (0) target = $region29
    $region28: #{tpu_custom_call.1} parent=1 // pred_region
      %48 = dma.done [#allocation6], 2048
    $region29: #{tpu_custom_call.1} parent=1 // pred_fallthru
      _
    %v50 = vld [vmem:[%s0] sm:$0xff]
    %v51 = vld [vmem:[%s0 + $0x8] sm:$0xff]
    %v52 = vadd.s32 %v50, 128
    %v53 = vadd.s32 %v51, 128
    %v54 = vlaneseq
    %v55 = vand.u32 %v54, 127
    %v56 = vadd.s32 %v55, 128
    %57 = vset.pattern.permute.xlu0 0
    %58 = vperm.xlu0 %57, %v50
    %v59 = vpop.permute.xlu0 %58
    %60 = vset.pattern.permute.xlu0 0
    %61 = vperm.xlu0 %60, %v51
    %v62 = vpop.permute.xlu0 %61
    %vm63 = vcmp.eq.s32.totalorder %v55, %v59
    %vm64 = vcmp.eq.s32.totalorder %v56, %v59
    %vm65 = vcmp.eq.s32.totalorder %v55, %v62
    %vm66 = vcmp.eq.s32.totalorder %v56, %v62
    %67 = vset.pattern.permute.xlu0 1
    %68 = vperm.xlu0 %67, %v52
    %v69 = vpop.permute.xlu0 %68
    %70 = vset.pattern.permute.xlu0 1
    %71 = vperm.xlu0 %70, %v53
    %v72 = vpop.permute.xlu0 %71
    %vm73 = vcmp.eq.s32.totalorder %v55, %v69
    %vm74 = vcmp.eq.s32.totalorder %v56, %v69
    %vm75 = vcmp.eq.s32.totalorder %v55, %v72
    %vm76 = vcmp.eq.s32.totalorder %v56, %v72
    %vm77 = vmor %vm63, %vm73
    %vm78 = vmor %vm64, %vm74
    %vm79 = vmor %vm65, %vm75
    %vm80 = vmor %vm66, %vm76
    %v81 = vsel %vm77, 1.0, 0.0
    %v82 = vsel %vm78, 1.0, 0.0
    %v83 = vsel %vm79, 1.0, 0.0
    %v84 = vsel %vm80, 1.0, 0.0
    %v85 = vpack.c.bf16 %v83, %v81
    %v86 = vpack.c.bf16 %v84, %v82
    %v87 = vld [vmem:[#allocation2] sm:$0xf]
    %v88 = vld [vmem:[#allocation2 + $0x4] sm:$0xf]
    %v89 = vld [vmem:[#allocation2 + $0x8] sm:$0xf]
    %v90 = vld [vmem:[#allocation2 + $0xc] sm:$0xf]
    %v91 = vld [vmem:[#allocation2 + $0x10] sm:$0xf]
    %v92 = vld [vmem:[#allocation2 + $0x14] sm:$0xf]
    %v93 = vld [vmem:[#allocation2 + $0x18] sm:$0xf]
    %v94 = vld [vmem:[#allocation2 + $0x1c] sm:$0xf]
    %v95 = vld [vmem:[#allocation2 + $0x20] sm:$0xf]
    %v96 = vld [vmem:[#allocation2 + $0x24] sm:$0xf]
    %v97 = vld [vmem:[#allocation2 + $0x28] sm:$0xf]
    %v98 = vld [vmem:[#allocation2 + $0x2c] sm:$0xf]
    %v99 = vld [vmem:[#allocation2 + $0x30] sm:$0xf]
    %v100 = vld [vmem:[#allocation2 + $0x34] sm:$0xf]
    %v101 = vld [vmem:[#allocation2 + $0x38] sm:$0xf]
    %v102 = vld [vmem:[#allocation2 + $0x3c] sm:$0xf]
    %v103 = vld [vmem:[#allocation2 + $0x40] sm:$0xf]
    %v104 = vld [vmem:[#allocation2 + $0x44] sm:$0xf]
    %v105 = vld [vmem:[#allocation2 + $0x48] sm:$0xf]
    %v106 = vld [vmem:[#allocation2 + $0x4c] sm:$0xf]
    %v107 = vld [vmem:[#allocation2 + $0x50] sm:$0xf]
    %v108 = vld [vmem:[#allocation2 + $0x54] sm:$0xf]
    %v109 = vld [vmem:[#allocation2 + $0x58] sm:$0xf]
    %v110 = vld [vmem:[#allocation2 + $0x5c] sm:$0xf]
    %v111 = vld [vmem:[#allocation2 + $0x60] sm:$0xf]
    %v112 = vld [vmem:[#allocation2 + $0x64] sm:$0xf]
    %v113 = vld [vmem:[#allocation2 + $0x68] sm:$0xf]
    %v114 = vld [vmem:[#allocation2 + $0x6c] sm:$0xf]
    %v115 = vld [vmem:[#allocation2 + $0x70] sm:$0xf]
    %v116 = vld [vmem:[#allocation2 + $0x74] sm:$0xf]
    %v117 = vld [vmem:[#allocation2 + $0x78] sm:$0xf]
    %v118 = vld [vmem:[#allocation2 + $0x7c] sm:$0xf]
    %v119 = vld [vmem:[#allocation5] sm:$0xf]
    %v120 = vld [vmem:[#allocation5 + $0x4] sm:$0xf]
    %v121 = vld [vmem:[#allocation5 + $0x8] sm:$0xf]
    %v122 = vld [vmem:[#allocation5 + $0xc] sm:$0xf]
    %v123 = vld [vmem:[#allocation5 + $0x10] sm:$0xf]
    %v124 = vld [vmem:[#allocation5 + $0x14] sm:$0xf]
    %v125 = vld [vmem:[#allocation5 + $0x18] sm:$0xf]
    %v126 = vld [vmem:[#allocation5 + $0x1c] sm:$0xf]
    %v127 = vld [vmem:[#allocation5 + $0x20] sm:$0xf]
    %v128 = vld [vmem:[#allocation5 + $0x24] sm:$0xf]
    %v129 = vld [vmem:[#allocation5 + $0x28] sm:$0xf]
    %v130 = vld [vmem:[#allocation5 + $0x2c] sm:$0xf]
    %v131 = vld [vmem:[#allocation5 + $0x30] sm:$0xf]
    %v132 = vld [vmem:[#allocation5 + $0x34] sm:$0xf]
    %v133 = vld [vmem:[#allocation5 + $0x38] sm:$0xf]
    %v134 = vld [vmem:[#allocation5 + $0x3c] sm:$0xf]
    %v135 = vld [vmem:[#allocation5 + $0x40] sm:$0xf]
    %v136 = vld [vmem:[#allocation5 + $0x44] sm:$0xf]
    %v137 = vld [vmem:[#allocation5 + $0x48] sm:$0xf]
    %v138 = vld [vmem:[#allocation5 + $0x4c] sm:$0xf]
    %v139 = vld [vmem:[#allocation5 + $0x50] sm:$0xf]
    %v140 = vld [vmem:[#allocation5 + $0x54] sm:$0xf]
    %v141 = vld [vmem:[#allocation5 + $0x58] sm:$0xf]
    %v142 = vld [vmem:[#allocation5 + $0x5c] sm:$0xf]
    %v143 = vld [vmem:[#allocation5 + $0x60] sm:$0xf]
    %v144 = vld [vmem:[#allocation5 + $0x64] sm:$0xf]
    %v145 = vld [vmem:[#allocation5 + $0x68] sm:$0xf]
    %v146 = vld [vmem:[#allocation5 + $0x6c] sm:$0xf]
    %v147 = vld [vmem:[#allocation5 + $0x70] sm:$0xf]
    %v148 = vld [vmem:[#allocation5 + $0x74] sm:$0xf]
    %v149 = vld [vmem:[#allocation5 + $0x78] sm:$0xf]
    %v150 = vld [vmem:[#allocation5 + $0x7c] sm:$0xf]
    %v183 = vunpack.c.l.b16 %v119
    %v184 = vunpack.c.l.b16 %v120
    %v185 = vunpack.c.l.b16 %v121
    %v186 = vunpack.c.l.b16 %v122
    %v187 = vunpack.c.l.b16 %v123
    %v188 = vunpack.c.l.b16 %v124
    %v189 = vunpack.c.l.b16 %v125
    %v190 = vunpack.c.l.b16 %v126
    %v191 = vunpack.c.l.b16 %v127
    %v192 = vunpack.c.l.b16 %v128
    %v193 = vunpack.c.l.b16 %v129
    %v194 = vunpack.c.l.b16 %v130
    %v195 = vunpack.c.l.b16 %v131
    %v196 = vunpack.c.l.b16 %v132
    %v197 = vunpack.c.l.b16 %v133
    %v198 = vunpack.c.l.b16 %v134
    %v199 = vunpack.c.l.b16 %v135
    %v200 = vunpack.c.l.b16 %v136
    %v201 = vunpack.c.l.b16 %v137
    %v202 = vunpack.c.l.b16 %v138
    %v203 = vunpack.c.l.b16 %v139
    %v204 = vunpack.c.l.b16 %v140
    %v205 = vunpack.c.l.b16 %v141
    %v206 = vunpack.c.l.b16 %v142
    %v207 = vunpack.c.l.b16 %v143
    %v208 = vunpack.c.l.b16 %v144
    %v209 = vunpack.c.l.b16 %v145
    %v210 = vunpack.c.l.b16 %v146
    %v211 = vunpack.c.l.b16 %v147
    %v212 = vunpack.c.l.b16 %v148
    %v213 = vunpack.c.l.b16 %v149
    %v214 = vunpack.c.l.b16 %v150
    %v215 = vpack.c.b16 %v184, %v183
    %v216 = vpack.c.b16 %v186, %v185
    %v217 = vpack.c.b16 %v188, %v187
    %v218 = vpack.c.b16 %v190, %v189
    %v219 = vpack.c.b16 %v192, %v191
    %v220 = vpack.c.b16 %v194, %v193
    %v221 = vpack.c.b16 %v196, %v195
    %v222 = vpack.c.b16 %v198, %v197
    %v223 = vpack.c.b16 %v200, %v199
    %v224 = vpack.c.b16 %v202, %v201
    %v225 = vpack.c.b16 %v204, %v203
    %v226 = vpack.c.b16 %v206, %v205
    %v227 = vpack.c.b16 %v208, %v207
    %v228 = vpack.c.b16 %v210, %v209
    %v229 = vpack.c.b16 %v212, %v211
    %v230 = vpack.c.b16 %v214, %v213
    %247 = vmatprep.subr.bf16.mxu0 0
    %248 = vmatpush1.bf16.msra.mxu0 %v222
    %249 = vmatprep.subr.bf16.mxu0 0
    %250 = vmatpush1.bf16.msra.mxu0 %v221
    %251 = vmatprep.subr.bf16.mxu0 0
    %252 = vmatpush1.bf16.msra.mxu0 %v220
    %253 = vmatprep.subr.bf16.mxu0 0
    %254 = vmatpush1.bf16.msra.mxu0 %v219
    %255 = vmatprep.subr.bf16.mxu0 0
    %256 = vmatpush1.bf16.msra.mxu0 %v218
    %257 = vmatprep.subr.bf16.mxu0 0
    %258 = vmatpush1.bf16.msra.mxu0 %v217
    %259 = vmatprep.subr.bf16.mxu0 0
    %260 = vmatpush1.bf16.msra.mxu0 %v216
    %261 = vmatprep.subr.bf16.mxu0 0
    %262 = vmatpush1.bf16.msra.mxu0 %v215
    %263 = vmatprep.subr.bf16.mxu0 0
    %264 = vmatpush2.bf16.msra.mxu0 %v230
    %265 = vmatprep.subr.bf16.mxu0 0
    %266 = vmatpush2.bf16.msra.mxu0 %v229
    %267 = vmatprep.subr.bf16.mxu0 0
    %268 = vmatpush2.bf16.msra.mxu0 %v228
    %269 = vmatprep.subr.bf16.mxu0 0
    %270 = vmatpush2.bf16.msra.mxu0 %v227
    %271 = vmatprep.subr.bf16.mxu0 0
    %272 = vmatpush2.bf16.msra.mxu0 %v226
    %273 = vmatprep.subr.bf16.mxu0 0
    %274 = vmatpush2.bf16.msra.mxu0 %v225
    %275 = vmatprep.subr.bf16.mxu0 0
    %276 = vmatpush2.bf16.msra.mxu0 %v224
    %277 = vmatprep.subr.bf16.mxu0 0
    %278 = vmatpush2.bf16.msra.mxu0 %v223
    %279 = vmatprep.mubr.bf16.mxu0 %v86
    %280 = vmatmul.mubr.bf16.gmra.mxu0 %v85
    %v281 = vpop.f32.mrf.mxu0
    %v282 = vadd.f32 0.0, %v281
    %v283 = vpop.f32.mrf.mxu0
    %v284 = vpop.f32.mrf.mxu0
    %v285 = vadd.f32 0.0, %v284
    %v286 = vpop.f32.mrf.mxu0
    %287 = vdwg.mxu0
    %v320 = vunpack.c.l.b16 %v87
    %v321 = vunpack.c.l.b16 %v88
    %v322 = vunpack.c.l.b16 %v89
    %v323 = vunpack.c.l.b16 %v90
    %v324 = vunpack.c.l.b16 %v91
    %v325 = vunpack.c.l.b16 %v92
    %v326 = vunpack.c.l.b16 %v93
    %v327 = vunpack.c.l.b16 %v94
    %v328 = vunpack.c.l.b16 %v95
    %v329 = vunpack.c.l.b16 %v96
    %v330 = vunpack.c.l.b16 %v97
    %v331 = vunpack.c.l.b16 %v98
    %v332 = vunpack.c.l.b16 %v99
    %v333 = vunpack.c.l.b16 %v100
    %v334 = vunpack.c.l.b16 %v101
    %v335 = vunpack.c.l.b16 %v102
    %v336 = vunpack.c.l.b16 %v103
    %v337 = vunpack.c.l.b16 %v104
    %v338 = vunpack.c.l.b16 %v105
    %v339 = vunpack.c.l.b16 %v106
    %v340 = vunpack.c.l.b16 %v107
    %v341 = vunpack.c.l.b16 %v108
    %v342 = vunpack.c.l.b16 %v109
    %v343 = vunpack.c.l.b16 %v110
    %v344 = vunpack.c.l.b16 %v111
    %v345 = vunpack.c.l.b16 %v112
    %v346 = vunpack.c.l.b16 %v113
    %v347 = vunpack.c.l.b16 %v114
    %v348 = vunpack.c.l.b16 %v115
    %v349 = vunpack.c.l.b16 %v116
    %v350 = vunpack.c.l.b16 %v117
    %v351 = vunpack.c.l.b16 %v118
    %v352 = vpack.c.b16 %v321, %v320
    %v353 = vpack.c.b16 %v323, %v322
    %v354 = vpack.c.b16 %v325, %v324
    %v355 = vpack.c.b16 %v327, %v326
    %v356 = vpack.c.b16 %v329, %v328
    %v357 = vpack.c.b16 %v331, %v330
    %v358 = vpack.c.b16 %v333, %v332
    %v359 = vpack.c.b16 %v335, %v334
    %v360 = vpack.c.b16 %v337, %v336
    %v361 = vpack.c.b16 %v339, %v338
    %v362 = vpack.c.b16 %v341, %v340
    %v363 = vpack.c.b16 %v343, %v342
    %v364 = vpack.c.b16 %v345, %v344
    %v365 = vpack.c.b16 %v347, %v346
    %v366 = vpack.c.b16 %v349, %v348
    %v367 = vpack.c.b16 %v351, %v350
    %384 = vmatprep.subr.bf16.mxu0 0
    %385 = vmatpush1.bf16.msra.mxu0 %v359
    %386 = vmatprep.subr.bf16.mxu0 0
    %387 = vmatpush1.bf16.msra.mxu0 %v358
    %388 = vmatprep.subr.bf16.mxu0 0
    %389 = vmatpush1.bf16.msra.mxu0 %v357
    %390 = vmatprep.subr.bf16.mxu0 0
    %391 = vmatpush1.bf16.msra.mxu0 %v356
    %392 = vmatprep.subr.bf16.mxu0 0
    %393 = vmatpush1.bf16.msra.mxu0 %v355
    %394 = vmatprep.subr.bf16.mxu0 0
    %395 = vmatpush1.bf16.msra.mxu0 %v354
    %396 = vmatprep.subr.bf16.mxu0 0
    %397 = vmatpush1.bf16.msra.mxu0 %v353
    %398 = vmatprep.subr.bf16.mxu0 0
    %399 = vmatpush1.bf16.msra.mxu0 %v352
    %400 = vmatprep.subr.bf16.mxu0 0
    %401 = vmatpush2.bf16.msra.mxu0 %v367
    %402 = vmatprep.subr.bf16.mxu0 0
    %403 = vmatpush2.bf16.msra.mxu0 %v366
    %404 = vmatprep.subr.bf16.mxu0 0
    %405 = vmatpush2.bf16.msra.mxu0 %v365
    %406 = vmatprep.subr.bf16.mxu0 0
    %407 = vmatpush2.bf16.msra.mxu0 %v364
    %408 = vmatprep.subr.bf16.mxu0 0
    %409 = vmatpush2.bf16.msra.mxu0 %v363
    %410 = vmatprep.subr.bf16.mxu0 0
    %411 = vmatpush2.bf16.msra.mxu0 %v362
    %412 = vmatprep.subr.bf16.mxu0 0
    %413 = vmatpush2.bf16.msra.mxu0 %v361
    %414 = vmatprep.subr.bf16.mxu0 0
    %415 = vmatpush2.bf16.msra.mxu0 %v360
    %416 = vmatprep.mubr.bf16.mxu0 %v86
    %417 = vmatmul.mubr.bf16.gmra.mxu0 %v85
    %v418 = vpop.f32.mrf.mxu0
    %v419 = vadd.f32 %v282, %v418
    %v420 = vpop.f32.mrf.mxu0
    %v421 = vpop.f32.mrf.mxu0
    %v422 = vadd.f32 %v285, %v421
    %v423 = vpop.f32.mrf.mxu0
    %424 = vdwg.mxu0
    %425 = vadd.xlane.f32.xlu0 %v419
    %v426 = vpop.xlane.xlu0 %425
    %427 = vadd.xlane.f32.xlu0 %v422
    %v428 = vpop.xlane.xlu0 %427
    %v429 = vmul.f32 %v426, 0.0078125
    %v430 = vmul.f32 %v428, 0.0078125
    %v431 = vsub.f32 %v419, %v429
    %v432 = vsub.f32 %v422, %v430
    %v433 = vmul.f32 %v431, %v431
    %v434 = vmul.f32 %v432, %v432
    %435 = vadd.xlane.f32.xlu0 %v433
    %v436 = vpop.xlane.xlu0 %435
    %437 = vadd.xlane.f32.xlu0 %v434
    %v438 = vpop.xlane.xlu0 %437
    %v439 = vmul.f32 %v436, 0.0078125
    %v440 = vmul.f32 %v438, 0.0078125
    %v441 = vadd.f32 %v439, 1e-05
    %v442 = vadd.f32 %v440, 1e-05
    %v443 = vrsqrt.pop %v441
    %v444 = vrsqrt.pop %v442
    %v445 = vmul.f32 %v431, %v443
    %v446 = vmul.f32 %v432, %v444
    %v447 = vld [vmem:[%s3] sm:$0x1]
    %v449 = vlaneseq
    %v450 = vshrl.u32 %v449, 7
    %v451 = vsub.s32 0, %v450
    %v452 = vrot.slane %v447, %v451
    %v454 = vmul.f32 %v445, %v452
    %v455 = vmul.f32 %v446, %v452
    %v456 = vld [vmem:[%s4] sm:$0x1]
    %v458 = vlaneseq
    %v459 = vshrl.u32 %v458, 7
    %v460 = vsub.s32 0, %v459
    %v461 = vrot.slane %v456, %v460
    %v463 = vadd.f32 %v454, %v461
    %v464 = vadd.f32 %v455, %v461
    %465 = vst [vmem:[#allocation7] sm:$0xff] %v463
    %466 = vst [vmem:[#allocation7 + $0x8] sm:$0xff] %v464
    // Predicated region
    $region30: #{tpu_custom_call.1} parent=1 // pred_check
      _
    $region31: #{tpu_custom_call.1} parent=1 // pred_check_branch
      %468 = sbr.rel (0) target = $region33
    $region32: #{tpu_custom_call.1} parent=1 // pred_region
      %s470 = ssub.s32 256, 256
      %471 = vsyncadd [#allocation4], %s470
      %s472 = sshll.u32 [#allocation7], 4
      %s473 = int_to_ptr.vmem [resolvable:$true] %s472
      %478 = dma.vmem_to_hbm [thread:$0]  %s473, 256, %s5, [#allocation4], 128, 128, 8
    $region33: #{tpu_custom_call.1} parent=1 // pred_fallthru
      _
    // Predicated region
    $region34: #{tpu_custom_call.1} parent=1 // pred_check
      _
    $region35: #{tpu_custom_call.1} parent=1 // pred_check_branch
      %480 = sbr.rel (0) target = $region37
    $region36: #{tpu_custom_call.1} parent=1 // pred_region
      %481 = dma.done [#allocation4], 256
    $region37: #{tpu_custom_call.1} parent=1 // pred_fallthru
      _
    %482 = vsyncpa [#allocation3], 1
    %483 = vsyncpa [#allocation6], 1
    %484 = vsyncpa [#allocation4], 1

</llo_original>
